<compile_context>
chip_gen: v5e
topology: v5e:2x2
jax: 0.10.0
libtpu: 0.0.40
codegen_flags: <defaults>
</compile_context>

<pallas_src>
import functools

import jax
import jax.numpy as jnp
from jax import lax
from jax.experimental import pallas as pl
from jax.experimental.pallas import tpu as pltpu


def _char_conv_kernel(x_ref, w_ref, b_ref, o_ref, xpad_ref, col_ref, *,
                      kmax, cin, pad_left, length, batch):
    """Fused multi-filter conv1d (all filters, all batch, one step).

    x_ref   : (B, Cin, L)            input, NCL
    w_ref   : (Cout_total, Kmax*Cin) fused + flattened weights
    b_ref   : (Cout_total, 1)        fused bias (f32)
    o_ref   : (B, Cout_total, L)     output, NCL
    xpad_ref: (B, Cin, L + Kmax - 1) VMEM scratch (zero-padded input)
    col_ref : (B, Kmax*Cin, L)       VMEM scratch (im2col columns)
    """
    L = length

    # 1) Zero-pad the input inside VMEM (no HBM copy of a padded x).
    xpad_ref[...] = jnp.zeros_like(xpad_ref)
    xpad_ref[:, :, pad_left:pad_left + L] = x_ref[...].astype(xpad_ref.dtype)

    # 2) im2col: col[b, k*Cin + ci, l] = xpad[b, ci, l + k].
    #    Kmax is a small static constant -> unrolled slice copies.
    for k in range(kmax):
        col_ref[:, k * cin:(k + 1) * cin, :] = xpad_ref[:, :, k:k + L]

    # 3) One fused MXU matmul per batch element + f32 bias epilogue.
    w = w_ref[...]
    bias = b_ref[...]                       # (Cout_total, 1) broadcasts over L
    for b in range(batch):                  # B is tiny & static -> unrolled
        acc = jnp.dot(w, col_ref[b], preferred_element_type=jnp.float32)
        o_ref[b] = (acc + bias).astype(o_ref.dtype)


def _fuse_params(params, filters, cin, kmax, dtype):
    """Builds the fused (Cout_total, Kmax*Cin) weight and (Cout_total, 1) bias.

    Tap offset per filter reproduces that filter's own left/right padding
    split inside the shared Kmax-tap window.
    """
    pad_left_max = (kmax - 1) // 2
    cout_total = sum(w.shape[0] for (w, _) in params)
    w_big = jnp.zeros((cout_total, cin, kmax), dtype=dtype)
    biases = []
    co = 0
    for (w, b), k in zip(params, filters):
        cout = w.shape[0]
        off = pad_left_max - (k - 1) // 2
        w_big = w_big.at[co:co + cout, :, off:off + k].set(w.astype(dtype))
        biases.append(b.astype(jnp.float32))
        co += cout
    # Flatten so w_flat[o, k*Cin + ci] == w_big[o, ci, k]  (matches im2col).
    w_flat = jnp.transpose(w_big, (0, 2, 1)).reshape(cout_total, kmax * cin)
    bias_col = jnp.concatenate(biases).reshape(cout_total, 1)
    return w_flat, bias_col, cout_total


def char_conv_forward(x_ncl, params, filters):
    """Full CharConv forward.  x_ncl: (B, Cin, L), PyTorch NCL layout."""
    B, Cin, L = x_ncl.shape
    kmax = max(filters)
    pad_left_max = (kmax - 1) // 2
    Lp = L + kmax - 1

    # Weight fusion is tiny one-time glue (would be precomputed at init in a
    # real model).
    w_flat, bias_col, cout_total = _fuse_params(
        params, filters, Cin, kmax, x_ncl.dtype)

    kernel = functools.partial(
        _char_conv_kernel, kmax=kmax, cin=Cin, pad_left=pad_left_max,
        length=L, batch=B)

    # TODO(synk): for large B/L on v7x, split a leading axis into a length>=2
    # "parallel" grid so both TensorCores are used; at this size one step wins.
    out = pl.pallas_call(
        kernel,
        out_shape=jax.ShapeDtypeStruct((B, cout_total, L), x_ncl.dtype),
        grid_spec=pltpu.PrefetchScalarGridSpec(
            num_scalar_prefetch=0,
            grid=(1,),
            in_specs=[
                pl.BlockSpec((B, Cin, L), lambda i: (0, 0, 0)),
                pl.BlockSpec((cout_total, kmax * Cin), lambda i: (0, 0)),
                pl.BlockSpec((cout_total, 1), lambda i: (0, 0)),
            ],
            out_specs=pl.BlockSpec((B, cout_total, L), lambda i: (0, 0, 0)),
            scratch_shapes=[
                pltpu.VMEM((B, Cin, Lp), jnp.float32),
                pltpu.VMEM((B, kmax * Cin, L), jnp.float32),
            ],
        ),
        compiler_params=pltpu.CompilerParams(
            dimension_semantics=("arbitrary",)),
    )(x_ncl, w_flat, bias_col)
    return out  # (B, sum(features), L); channel order == torch.cat(dim=1)


def _reference_forward(x_ncl, params, filters):
    """Pure-JAX reference (lax.conv) mirroring the PyTorch semantics."""
    outs = []
    for (w, b), k in zip(params, filters):
        pad_total = k - 1
        pad_left = pad_total // 2
        pad_right = pad_total - pad_left
        o = lax.conv_general_dilated(
            x_ncl, w, window_strides=(1,),
            padding=[(pad_left, pad_right)],
            dimension_numbers=("NCH", "OIH", "NCH"),
        )
        outs.append(o + b.reshape(1, -1, 1))
    return jnp.concatenate(outs, axis=1)


if __name__ == "__main__":
    # Small deterministic config consistent with CharConv(__init__):
    # in_feature=4, filters=[1, 3, 5], features=[8, 16, 8]
    B, Cin, L = 2, 4, 16
    filters = [1, 3, 5]
    features = [8, 16, 8]

    key = jax.random.PRNGKey(0)
    key, kx = jax.random.split(key)
    x = jax.random.normal(kx, (B, Cin, L), dtype=jnp.float32)

    params = []
    for k, cout in zip(filters, features):
        key, kw, kb = jax.random.split(key, 3)
        w = jax.random.normal(kw, (cout, Cin, k), dtype=jnp.float32) * 0.1
        b = jax.random.normal(kb, (cout,), dtype=jnp.float32) * 0.1
        params.append((w, b))

    out = char_conv_forward(x, params, filters)
    out = jax.block_until_ready(out)

    ref = jax.block_until_ready(_reference_forward(x, params, filters))
    assert out.shape == (B, sum(features), L), out.shape
    assert jnp.allclose(out, ref, atol=1e-4, rtol=1e-4), float(
        jnp.max(jnp.abs(out - ref))
    )
    print("KERNEL_OK")
</pallas_src>

<mosaic_0001>
module attributes {stable_mosaic.version = 11 : i64} {
  func.func @_char_conv_kernel(%arg0: i32, %arg1: memref<2x4x16xf32, #tpu.memory_space<vmem>>, %arg2: memref<32x20xf32, #tpu.memory_space<vmem>>, %arg3: memref<32x1xf32, #tpu.memory_space<vmem>>, %arg4: memref<2x32x16xf32, #tpu.memory_space<vmem>>, %arg5: memref<2x4x20xf32, #tpu.memory_space<vmem>>, %arg6: memref<2x20x16xf32, #tpu.memory_space<vmem>>) attributes {dimension_semantics = [#tpu.dimension_semantics<arbitrary>], iteration_bounds = array<i64: 1>, scalar_prefetch = 0 : i64, scratch_operands = 2 : i64, tpu.core_type = #tpu.core_type<tc>, window_params = [{pipeline_mode = #tpu.pipeline_mode<synchronous>, transform_indices = @transform_0, window_bounds = array<i64: 2, 4, 16>}, {pipeline_mode = #tpu.pipeline_mode<synchronous>, transform_indices = @transform_1, window_bounds = array<i64: 32, 20>}, {pipeline_mode = #tpu.pipeline_mode<synchronous>, transform_indices = @transform_2, window_bounds = array<i64: 32, 1>}, {pipeline_mode = #tpu.pipeline_mode<synchronous>, transform_indices = @transform_3, window_bounds = array<i64: 2, 32, 16>}]} {
    %cst = arith.constant 0.000000e+00 : f32
    %0 = vector.broadcast %cst : f32 to vector<2x4x20xf32>
    %c0 = arith.constant 0 : index
    %c0_0 = arith.constant 0 : index
    %c0_1 = arith.constant 0 : index
    %1 = vector.load %arg5[%c0, %c0_0, %c0_1] : memref<2x4x20xf32, #tpu.memory_space<vmem>>, vector<2x4x20xf32>
    tpu.vector_store %arg5[%c0, %c0_0, %c0_1], %0 {strides = array<i32>} : memref<2x4x20xf32, #tpu.memory_space<vmem>>, vector<2x4x20xf32>,
    %c0_2 = arith.constant 0 : index
    %c0_3 = arith.constant 0 : index
    %c0_4 = arith.constant 0 : index
    %2 = vector.load %arg1[%c0_2, %c0_3, %c0_4] : memref<2x4x16xf32, #tpu.memory_space<vmem>>, vector<2x4x16xf32>
    %c0_5 = arith.constant 0 : index
    %c0_6 = arith.constant 0 : index
    %c2 = arith.constant 2 : index
    %3 = vector.load %arg5[%c0_5, %c0_6, %c2] : memref<2x4x20xf32, #tpu.memory_space<vmem>>, vector<2x4x16xf32>
    tpu.vector_store %arg5[%c0_5, %c0_6, %c2], %2 {strides = array<i32>} : memref<2x4x20xf32, #tpu.memory_space<vmem>>, vector<2x4x16xf32>,
    %c0_7 = arith.constant 0 : index
    %c0_8 = arith.constant 0 : index
    %c0_9 = arith.constant 0 : index
    %4 = vector.load %arg5[%c0_7, %c0_8, %c0_9] : memref<2x4x20xf32, #tpu.memory_space<vmem>>, vector<2x4x16xf32>
    %c0_10 = arith.constant 0 : index
    %c0_11 = arith.constant 0 : index
    %c0_12 = arith.constant 0 : index
    %5 = vector.load %arg6[%c0_10, %c0_11, %c0_12] : memref<2x20x16xf32, #tpu.memory_space<vmem>>, vector<2x4x16xf32>
    tpu.vector_store %arg6[%c0_10, %c0_11, %c0_12], %4 {strides = array<i32>} : memref<2x20x16xf32, #tpu.memory_space<vmem>>, vector<2x4x16xf32>,
    %c0_13 = arith.constant 0 : index
    %c0_14 = arith.constant 0 : index
    %c1 = arith.constant 1 : index
    %6 = vector.load %arg5[%c0_13, %c0_14, %c1] : memref<2x4x20xf32, #tpu.memory_space<vmem>>, vector<2x4x16xf32>
    %c0_15 = arith.constant 0 : index
    %c4 = arith.constant 4 : index
    %c0_16 = arith.constant 0 : index
    %7 = vector.load %arg6[%c0_15, %c4, %c0_16] : memref<2x20x16xf32, #tpu.memory_space<vmem>>, vector<2x4x16xf32>
    tpu.vector_store %arg6[%c0_15, %c4, %c0_16], %6 {strides = array<i32>} : memref<2x20x16xf32, #tpu.memory_space<vmem>>, vector<2x4x16xf32>,
    %c0_17 = arith.constant 0 : index
    %c0_18 = arith.constant 0 : index
    %c2_19 = arith.constant 2 : index
    %8 = vector.load %arg5[%c0_17, %c0_18, %c2_19] : memref<2x4x20xf32, #tpu.memory_space<vmem>>, vector<2x4x16xf32>
    %c0_20 = arith.constant 0 : index
    %c8 = arith.constant 8 : index
    %c0_21 = arith.constant 0 : index
    %9 = vector.load %arg6[%c0_20, %c8, %c0_21] : memref<2x20x16xf32, #tpu.memory_space<vmem>>, vector<2x4x16xf32>
    tpu.vector_store %arg6[%c0_20, %c8, %c0_21], %8 {strides = array<i32>} : memref<2x20x16xf32, #tpu.memory_space<vmem>>, vector<2x4x16xf32>,
    %c0_22 = arith.constant 0 : index
    %c0_23 = arith.constant 0 : index
    %c3 = arith.constant 3 : index
    %10 = vector.load %arg5[%c0_22, %c0_23, %c3] : memref<2x4x20xf32, #tpu.memory_space<vmem>>, vector<2x4x16xf32>
    %c0_24 = arith.constant 0 : index
    %c12 = arith.constant 12 : index
    %c0_25 = arith.constant 0 : index
    %11 = vector.load %arg6[%c0_24, %c12, %c0_25] : memref<2x20x16xf32, #tpu.memory_space<vmem>>, vector<2x4x16xf32>
    tpu.vector_store %arg6[%c0_24, %c12, %c0_25], %10 {strides = array<i32>} : memref<2x20x16xf32, #tpu.memory_space<vmem>>, vector<2x4x16xf32>,
    %c0_26 = arith.constant 0 : index
    %c0_27 = arith.constant 0 : index
    %c4_28 = arith.constant 4 : index
    %12 = vector.load %arg5[%c0_26, %c0_27, %c4_28] : memref<2x4x20xf32, #tpu.memory_space<vmem>>, vector<2x4x16xf32>
    %c0_29 = arith.constant 0 : index
    %c16 = arith.constant 16 : index
    %c0_30 = arith.constant 0 : index
    %13 = vector.load %arg6[%c0_29, %c16, %c0_30] : memref<2x20x16xf32, #tpu.memory_space<vmem>>, vector<2x4x16xf32>
    tpu.vector_store %arg6[%c0_29, %c16, %c0_30], %12 {strides = array<i32>} : memref<2x20x16xf32, #tpu.memory_space<vmem>>, vector<2x4x16xf32>,
    %c0_31 = arith.constant 0 : index
    %c0_32 = arith.constant 0 : index
    %14 = vector.load %arg2[%c0_31, %c0_32] : memref<32x20xf32, #tpu.memory_space<vmem>>, vector<32x20xf32>
    %c0_33 = arith.constant 0 : index
    %c0_34 = arith.constant 0 : index
    %15 = vector.load %arg3[%c0_33, %c0_34] : memref<32x1xf32, #tpu.memory_space<vmem>>, vector<32x1xf32>
    %c0_35 = arith.constant 0 : index
    %c0_36 = arith.constant 0 : index
    %c0_37 = arith.constant 0 : index
    %16 = vector.load %arg6[%c0_35, %c0_36, %c0_37] : memref<2x20x16xf32, #tpu.memory_space<vmem>>, vector<1x20x16xf32>
    %17 = vector.shape_cast %16 : vector<1x20x16xf32> to vector<20x16xf32>
    %cst_38 = arith.constant dense<0.000000e+00> : vector<32x16xf32>
    %18 = tpu.matmul %14, %17, %cst_38 {dimension_numbers = #tpu.dot_dimension_numbers<[1], [0], [0], [1], [0, 0, 1, 1], [], []>} : vector<32x20xf32>, vector<20x16xf32>, vector<32x16xf32> -> vector<32x16xf32>
    %19 = vector.broadcast %15 : vector<32x1xf32> to vector<32x16xf32>
    %20 = arith.addf %18, %19 : vector<32x16xf32>
    %c0_39 = arith.constant 0 : index
    %c0_40 = arith.constant 0 : index
    %c0_41 = arith.constant 0 : index
    %21 = vector.load %arg4[%c0_39, %c0_40, %c0_41] : memref<2x32x16xf32, #tpu.memory_space<vmem>>, vector<1x32x16xf32>
    %22 = vector.shape_cast %21 : vector<1x32x16xf32> to vector<32x16xf32>
    %23 = vector.shape_cast %20 : vector<32x16xf32> to vector<1x32x16xf32>
    tpu.vector_store %arg4[%c0_39, %c0_40, %c0_41], %23 {strides = array<i32>} : memref<2x32x16xf32, #tpu.memory_space<vmem>>, vector<1x32x16xf32>,
    %c1_42 = arith.constant 1 : index
    %c0_43 = arith.constant 0 : index
    %c0_44 = arith.constant 0 : index
    %24 = vector.load %arg6[%c1_42, %c0_43, %c0_44] : memref<2x20x16xf32, #tpu.memory_space<vmem>>, vector<1x20x16xf32>
    %25 = vector.shape_cast %24 : vector<1x20x16xf32> to vector<20x16xf32>
    %cst_45 = arith.constant dense<0.000000e+00> : vector<32x16xf32>
    %26 = tpu.matmul %14, %25, %cst_45 {dimension_numbers = #tpu.dot_dimension_numbers<[1], [0], [0], [1], [0, 0, 1, 1], [], []>} : vector<32x20xf32>, vector<20x16xf32>, vector<32x16xf32> -> vector<32x16xf32>
    %27 = vector.broadcast %15 : vector<32x1xf32> to vector<32x16xf32>
    %28 = arith.addf %26, %27 : vector<32x16xf32>
    %c1_46 = arith.constant 1 : index
    %c0_47 = arith.constant 0 : index
    %c0_48 = arith.constant 0 : index
    %29 = vector.load %arg4[%c1_46, %c0_47, %c0_48] : memref<2x32x16xf32, #tpu.memory_space<vmem>>, vector<1x32x16xf32>
    %30 = vector.shape_cast %29 : vector<1x32x16xf32> to vector<32x16xf32>
    %31 = vector.shape_cast %28 : vector<32x16xf32> to vector<1x32x16xf32>
    tpu.vector_store %arg4[%c1_46, %c0_47, %c0_48], %31 {strides = array<i32>} : memref<2x32x16xf32, #tpu.memory_space<vmem>>, vector<1x32x16xf32>,
    return
  }
  func.func @transform_0(%arg0: i32) -> (i32, i32, i32) {
    %c0_i32 = arith.constant 0 : i32
    %c0_i32_0 = arith.constant 0 : i32
    %c0_i32_1 = arith.constant 0 : i32
    %c0_i32_2 = arith.constant 0 : i32
    return %c0_i32, %c0_i32_0, %c0_i32_1 : i32, i32, i32
  }
  func.func @transform_1(%arg0: i32) -> (i32, i32) {
    %c0_i32 = arith.constant 0 : i32
    %c0_i32_0 = arith.constant 0 : i32
    %c0_i32_1 = arith.constant 0 : i32
    return %c0_i32, %c0_i32_0 : i32, i32
  }
  func.func @transform_2(%arg0: i32) -> (i32, i32) {
    %c0_i32 = arith.constant 0 : i32
    %c0_i32_0 = arith.constant 0 : i32
    %c0_i32_1 = arith.constant 0 : i32
    return %c0_i32, %c0_i32_0 : i32, i32
  }
  func.func @transform_3(%arg0: i32) -> (i32, i32, i32) {
    %c0_i32 = arith.constant 0 : i32
    %c0_i32_0 = arith.constant 0 : i32
    %c0_i32_1 = arith.constant 0 : i32
    %c0_i32_2 = arith.constant 0 : i32
    return %c0_i32, %c0_i32_0, %c0_i32_1 : i32, i32, i32
  }
}

</mosaic_0001>

<llo_original>
// kernel: tpu_custom_call.1
$region0: #{tpu_custom_call.1}
  #allocation0 [shape = 'u32[]', space=smem, size = 0x4, offset = 0x4, fixed_abs, tag = 'smem constant byte address 0x4 - core index']
  #allocation1 [shape = 'u32[72,128]{1,0:T(1,128)}', space=vmem, size = 0x9000, scoped, tag = 'internal scratch']
  #allocation2 [shape = 'f32[2,4,20]{2,1,0:T(4,128)}', space=vmem, size = 0x1000, scoped, tag = 'scratch operand']
  #allocation3 [shape = 'f32[2,20,16]{2,1,0:T(8,128)}', space=vmem, size = 0x6000, scoped, tag = 'scratch operand']
  %s0 = inlined_call_operand.vmem [shape: f32[2,4,16], index: 0, kind: input, shape index: {}]
  %s1 = inlined_call_operand.vmem [shape: f32[32,20], index: 1, kind: input, shape index: {}]
  %s2 = inlined_call_operand.vmem [shape: f32[32,1], index: 2, kind: input, shape index: {}]
  %s3 = inlined_call_operand.vmem [shape: f32[2,32,16], index: 3, kind: output, shape index: {}]
  %s4 = sld [smem:[#allocation0]]
  $region22: #{tpu_custom_call.1} parent=0
    _
  %s6 = ssub.s32 1, %s4
  %s7 = scalar_select 0, %s6, %s4
  // Predicated region
  $region2: #{tpu_custom_call.1} parent=0 // pred_check
    _
  $region3: #{tpu_custom_call.1} parent=0 // pred_check_branch
    %9 = sbr.rel (0) target = $region5
  $region4: #{tpu_custom_call.1} parent=0 // pred_region
    _
  $region5: #{tpu_custom_call.1} parent=0 // pred_fallthru
    _
  // Predicated region
  $region6: #{tpu_custom_call.1} parent=0 // pred_check
    _
  $region7: #{tpu_custom_call.1} parent=0 // pred_check_branch
    %11 = sbr.rel (0) target = $region9
  $region8: #{tpu_custom_call.1} parent=0 // pred_region
    _
  $region9: #{tpu_custom_call.1} parent=0 // pred_fallthru
    _
  // Predicated region
  $region10: #{tpu_custom_call.1} parent=0 // pred_check
    _
  $region11: #{tpu_custom_call.1} parent=0 // pred_check_branch
    %13 = sbr.rel (0) target = $region13
  $region12: #{tpu_custom_call.1} parent=0 // pred_region
    _
  $region13: #{tpu_custom_call.1} parent=0 // pred_fallthru
    _
  %vm14 = vcmask 158720
  %15 = vst.msk [vmem:[#allocation2] sm:$0xf] %vm14, 0.0
  %16 = vst.msk [vmem:[#allocation2 + $0x4] sm:$0xf] %vm14, 0.0
  %v17 = vld [vmem:[%s0] sm:$0xf]
  %v18 = vld [vmem:[%s0 + $0x4] sm:$0xf]
  %21 = vrot.lane.b32.xlu0 %v17, 2
  %v22 = vpop.permute.xlu0 %21
  %23 = vrot.lane.b32.xlu0 %v18, 2
  %v24 = vpop.permute.xlu0 %23
  %vm27 = vcmask 142352
  %28 = vst.msk [vmem:[#allocation2] sm:$0xf] %vm27, %v22
  %29 = vst.msk [vmem:[#allocation2 + $0x4] sm:$0xf] %vm27, %v24
  %v30 = vld [vmem:[#allocation2] sm:$0xf]
  %v31 = vld [vmem:[#allocation2 + $0x4] sm:$0xf]
  %vm32 = vcmask 125952
  %33 = vst.msk [vmem:[#allocation3] sm:$0xf] %vm32, %v30
  %34 = vst.msk [vmem:[#allocation3 + $0x18] sm:$0xf] %vm32, %v31
  %v35 = vld [vmem:[#allocation2] sm:$0xf]
  %v36 = vld [vmem:[#allocation2 + $0x4] sm:$0xf]
  %39 = vrot.lane.b32.xlu0 %v35, 127
  %v40 = vpop.permute.xlu0 %39
  %41 = vrot.lane.b32.xlu0 %v36, 127
  %v42 = vpop.permute.xlu0 %41
  %45 = vst.msk [vmem:[#allocation3 + $0x4] sm:$0xf] %vm32, %v40
  %46 = vst.msk [vmem:[#allocation3 + $0x1c] sm:$0xf] %vm32, %v42
  %v47 = vld [vmem:[#allocation2] sm:$0xf]
  %v48 = vld [vmem:[#allocation2 + $0x4] sm:$0xf]
  %51 = vrot.lane.b32.xlu0 %v47, 126
  %v52 = vpop.permute.xlu0 %51
  %53 = vrot.lane.b32.xlu0 %v48, 126
  %v54 = vpop.permute.xlu0 %53
  %57 = vst.msk [vmem:[#allocation3 + $0x8] sm:$0xf] %vm32, %v52
  %58 = vst.msk [vmem:[#allocation3 + $0x20] sm:$0xf] %vm32, %v54
  %v59 = vld [vmem:[#allocation2] sm:$0xf]
  %v60 = vld [vmem:[#allocation2 + $0x4] sm:$0xf]
  %63 = vrot.lane.b32.xlu0 %v59, 125
  %v64 = vpop.permute.xlu0 %63
  %65 = vrot.lane.b32.xlu0 %v60, 125
  %v66 = vpop.permute.xlu0 %65
  %69 = vst.msk [vmem:[#allocation3 + $0xc] sm:$0xf] %vm32, %v64
  %70 = vst.msk [vmem:[#allocation3 + $0x24] sm:$0xf] %vm32, %v66
  %v71 = vld [vmem:[#allocation2] sm:$0xf]
  %v72 = vld [vmem:[#allocation2 + $0x4] sm:$0xf]
  %75 = vrot.lane.b32.xlu0 %v71, 124
  %v76 = vpop.permute.xlu0 %75
  %77 = vrot.lane.b32.xlu0 %v72, 124
  %v78 = vpop.permute.xlu0 %77
  %81 = vst.msk [vmem:[#allocation3 + $0x10] sm:$0xf] %vm32, %v76
  %82 = vst.msk [vmem:[#allocation3 + $0x28] sm:$0xf] %vm32, %v78
  %v83 = vld [vmem:[%s1] sm:$0xff]
  %v84 = vld [vmem:[%s1 + $0x8] sm:$0xff]
  %v85 = vld [vmem:[%s1 + $0x10] sm:$0xff]
  %v86 = vld [vmem:[%s1 + $0x18] sm:$0xff]
  %v87 = vld [vmem:[%s2] sm:$0xff]
  %v88 = vld [vmem:[%s2 + $0x8] sm:$0xff]
  %v89 = vld [vmem:[%s2 + $0x10] sm:$0xff]
  %v90 = vld [vmem:[%s2 + $0x18] sm:$0xff]
  %v91 = vld [vmem:[#allocation3] sm:$0xff]
  %v92 = vld [vmem:[#allocation3 + $0x8] sm:$0xff]
  %v93 = vld [vmem:[#allocation3 + $0x10] sm:$0xf]
  %95 = vset.pattern.permute.xlu0 0
  %96 = vperm.xlu0 %95, %v87
  %v97 = vpop.permute.xlu0 %96
  %100 = vset.pattern.permute.xlu0 0
  %101 = vperm.xlu0 %100, %v88
  %v102 = vpop.permute.xlu0 %101
  %105 = vset.pattern.permute.xlu0 0
  %106 = vperm.xlu0 %105, %v89
  %v107 = vpop.permute.xlu0 %106
  %110 = vset.pattern.permute.xlu0 0
  %111 = vperm.xlu0 %110, %v90
  %v112 = vpop.permute.xlu0 %111
  %vm114 = vcmask 162816
  %v116 = vsel %vm114, %v83, 0
  %v119 = vsel %vm114, %v84, 0
  %v122 = vsel %vm114, %v85, 0
  %v125 = vsel %vm114, %v86, 0
  %vm127 = vcmask 1043456
  %v129 = vsel %vm127, %v93, 0
  %131 = vmatpush.msra.mxu0 0.0
  %132 = vmatpush.msra.mxu0 0.0
  %133 = vmatpush.msra.mxu0 0.0
  %134 = vmatpush.msra.mxu0 0.0
  %135 = vmatpush.msra.mxu0 0.0
  %136 = vmatpush.msra.mxu0 0.0
  %137 = vmatpush.msra.mxu0 0.0
  %138 = vmatpush.msra.mxu0 0.0
  %139 = vmatpush.msra.mxu0 0.0
  %140 = vmatpush.msra.mxu0 0.0
  %141 = vmatpush.msra.mxu0 0.0
  %142 = vmatpush.msra.mxu0 0.0
  %143 = vmatpush.msra.mxu0 0.0
  %144 = vmatpush.msra.mxu0 %v129
  %145 = vmatpush.msra.mxu0 %v92
  %146 = vmatpush.msra.mxu0 %v91
  %147 = vmatmul.f32.gmra.mxu0 %v116
  %v148 = vpop.f32.mrf.mxu0
  %v149 = vadd.f32 %v97, %v148
  %150 = vmatmul.f32.gmra.mxu0 %v119
  %v151 = vpop.f32.mrf.mxu0
  %v152 = vadd.f32 %v102, %v151
  %153 = vmatmul.f32.gmra.mxu0 %v122
  %v154 = vpop.f32.mrf.mxu0
  %v155 = vadd.f32 %v107, %v154
  %156 = vmatmul.f32.gmra.mxu0 %v125
  %v157 = vpop.f32.mrf.mxu0
  %v158 = vadd.f32 %v112, %v157
  %159 = vdwg.mxu0
  %vm160 = vcmask 130048
  %161 = vst.msk [vmem:[%s3] sm:$0xff] %vm160, %v149
  %162 = vst.msk [vmem:[%s3 + $0x8] sm:$0xff] %vm160, %v152
  %163 = vst.msk [vmem:[%s3 + $0x10] sm:$0xff] %vm160, %v155
  %164 = vst.msk [vmem:[%s3 + $0x18] sm:$0xff] %vm160, %v158
  %s165 = scalar_lea.vmem [#allocation3], 24
  %v166 = vld [vmem:[%s165] sm:$0xff]
  %v167 = vld [vmem:[%s165 + $0x8] sm:$0xff]
  %v168 = vld [vmem:[%s165 + $0x10] sm:$0xf]
  %v170 = vsel %vm127, %v168, 0
  %172 = vmatpush.msra.mxu0 0.0
  %173 = vmatpush.msra.mxu0 0.0
  %174 = vmatpush.msra.mxu0 0.0
  %175 = vmatpush.msra.mxu0 0.0
  %176 = vmatpush.msra.mxu0 0.0
  %177 = vmatpush.msra.mxu0 0.0
  %178 = vmatpush.msra.mxu0 0.0
  %179 = vmatpush.msra.mxu0 0.0
  %180 = vmatpush.msra.mxu0 0.0
  %181 = vmatpush.msra.mxu0 0.0
  %182 = vmatpush.msra.mxu0 0.0
  %183 = vmatpush.msra.mxu0 0.0
  %184 = vmatpush.msra.mxu0 0.0
  %185 = vmatpush.msra.mxu0 %v170
  %186 = vmatpush.msra.mxu0 %v167
  %187 = vmatpush.msra.mxu0 %v166
  %188 = vmatmul.f32.gmra.mxu0 %v116
  %v189 = vpop.f32.mrf.mxu0
  %v190 = vadd.f32 %v97, %v189
  %191 = vmatmul.f32.gmra.mxu0 %v119
  %v192 = vpop.f32.mrf.mxu0
  %v193 = vadd.f32 %v102, %v192
  %194 = vmatmul.f32.gmra.mxu0 %v122
  %v195 = vpop.f32.mrf.mxu0
  %v196 = vadd.f32 %v107, %v195
  %197 = vmatmul.f32.gmra.mxu0 %v125
  %v198 = vpop.f32.mrf.mxu0
  %v199 = vadd.f32 %v112, %v198
  %200 = vdwg.mxu0
  %s201 = scalar_lea.vmem %s3, 32
  %202 = vst.msk [vmem:[%s201] sm:$0xff] %vm160, %v190
  %203 = vst.msk [vmem:[%s201 + $0x8] sm:$0xff] %vm160, %v193
  %204 = vst.msk [vmem:[%s201 + $0x10] sm:$0xff] %vm160, %v196
  %205 = vst.msk [vmem:[%s201 + $0x18] sm:$0xff] %vm160, %v199
  // Predicated region
  $region14: #{tpu_custom_call.1} parent=0 // pred_check
    _
  $region15: #{tpu_custom_call.1} parent=0 // pred_check_branch
    %207 = sbr.rel (0) target = $region17
  $region16: #{tpu_custom_call.1} parent=0 // pred_region
    _
  $region17: #{tpu_custom_call.1} parent=0 // pred_fallthru
    _
  // Predicated region
  $region18: #{tpu_custom_call.1} parent=0 // pred_check
    _
  $region19: #{tpu_custom_call.1} parent=0 // pred_check_branch
    %209 = sbr.rel (0) target = $region21
  $region20: #{tpu_custom_call.1} parent=0 // pred_region
    _
  $region21: #{tpu_custom_call.1} parent=0 // pred_fallthru
    _

</llo_original>
